<compile_context>
chip_gen: v7x
topology: tpu7x:2x2x1
jax: 0.10.0
libtpu: 0.0.40
codegen_flags: <defaults>
</compile_context>

<pallas_src>
import jax
import jax.numpy as jnp
from jax.experimental import pallas as pl
from jax.experimental.pallas import tpu as pltpu


def logreg_kernel(b_ref, x_ref, w_ref, o_ref):
    # b_ref: (1,)  f32 bias, scalar-prefetched into SMEM
    # x_ref: (TB, D) f32 batch tile
    # w_ref: (1, D)  f32 weight row (resident across all grid steps)
    # o_ref: (TB, 1) f32 output tile
    x = x_ref[...]
    w = w_ref[...]
    # Output width is 1 -> dot-product-per-row on the VPU/XLU instead of a
    # 1-column MXU matmul (removes wasted extended-slot traffic; HBM-bound
    # either way).
    logits = jnp.sum(x * w, axis=-1, keepdims=True) + b_ref[0]
    o_ref[...] = jax.nn.sigmoid(logits).astype(o_ref.dtype)


def logistic_regression_forward(x, w, b, *, block_batch=512):
    """x: (B, D) f32, w: (1, D) f32 (torch nn.Linear layout), b: (1,) f32 -> (B, 1) f32."""
    B, D = x.shape

    # Cap TB so the double-buffered x tiles (2 * TB * D * 4 B) stay ~<=16 MiB,
    # comfortable even on v7x's 64 MiB VMEM; bigger tiles just fill headroom.
    max_tb_for_vmem = max(8, (8 * 1024 * 1024) // (D * 4))
    TB = min(block_batch, B, max_tb_for_vmem)
    TB = max(8, ((TB + 7) // 8) * 8)  # f32 sublane alignment
    grid = (pl.cdiv(B, TB),)          # ragged last tile handled by block padding

    return pl.pallas_call(
        logreg_kernel,
        out_shape=jax.ShapeDtypeStruct((B, 1), jnp.float32),
        grid_spec=pltpu.PrefetchScalarGridSpec(
            num_scalar_prefetch=1,    # bias -> SMEM, no per-tile VMEM DMA
            grid=grid,
            in_specs=[
                # x: batch-tiled, D untiled (full-dim block satisfies (8,128) rule)
                pl.BlockSpec((TB, D), lambda i, b_s: (i, 0)),
                # weight row: constant index map -> stays resident, not re-DMA'd
                pl.BlockSpec((1, D), lambda i, b_s: (0, 0)),
            ],
            out_specs=pl.BlockSpec((TB, 1), lambda i, b_s: (i, 0)),
        ),
        compiler_params=pltpu.CompilerParams(
            dimension_semantics=("parallel",),   # shard batch tiles across TCs on v7x
            vmem_limit_bytes=64 << 20,           # keep big tiles on v5e (16 MiB default)
        ),
    )(b, x, w)


if __name__ == "__main__":
    key = jax.random.PRNGKey(0)
    batch, input_dim = 8, 32

    kx, kw, kb = jax.random.split(key, 3)
    x = jax.random.normal(kx, (batch, input_dim), dtype=jnp.float32)

    # Deterministic init mirroring nn.Linear's uniform(-1/sqrt(in), 1/sqrt(in))
    bound = 1.0 / (input_dim ** 0.5)
    w = jax.random.uniform(kw, (1, input_dim), jnp.float32, -bound, bound)  # torch (out, in) layout
    b = jax.random.uniform(kb, (1,), jnp.float32, -bound, bound)

    out = logistic_regression_forward(x, w, b)
    out = jax.block_until_ready(out)

    # Reference check in plain JAX
    ref = jax.nn.sigmoid(x @ w.T + b)
    assert out.shape == (batch, 1)
    assert jnp.allclose(out, ref, atol=1e-5, rtol=1e-5)

    print("KERNEL_OK")
</pallas_src>

<mosaic_0001>
module attributes {stable_mosaic.version = 11 : i64} {
  func.func @logreg_kernel(%arg0: i32, %arg1: memref<1xf32, #tpu.memory_space<smem>>, %arg2: memref<8x32xf32, #tpu.memory_space<vmem>>, %arg3: memref<1x32xf32, #tpu.memory_space<vmem>>, %arg4: memref<8x1xf32, #tpu.memory_space<vmem>>) attributes {dimension_semantics = [#tpu.dimension_semantics<parallel>], iteration_bounds = array<i64: 1>, scalar_prefetch = 1 : i64, scratch_operands = 0 : i64, tpu.core_type = #tpu.core_type<tc>, window_params = [{transform_indices = @transform_0, window_bounds = array<i64: 8, 32>}, {pipeline_mode = #tpu.pipeline_mode<synchronous>, transform_indices = @transform_1, window_bounds = array<i64: 1, 32>}, {transform_indices = @transform_2, window_bounds = array<i64: 8, 1>}]} {
    %c0 = arith.constant 0 : index
    %c0_0 = arith.constant 0 : index
    %0 = vector.load %arg2[%c0, %c0_0] : memref<8x32xf32, #tpu.memory_space<vmem>>, vector<8x32xf32>
    %c0_1 = arith.constant 0 : index
    %c0_2 = arith.constant 0 : index
    %1 = vector.load %arg3[%c0_1, %c0_2] : memref<1x32xf32, #tpu.memory_space<vmem>>, vector<1x32xf32>
    %2 = vector.broadcast %1 : vector<1x32xf32> to vector<8x32xf32>
    %3 = arith.mulf %0, %2 : vector<8x32xf32>
    %cst = arith.constant dense<0.000000e+00> : vector<8xf32>
    %4 = vector.multi_reduction <add>, %3, %cst [1] : vector<8x32xf32> to vector<8xf32>
    %5 = vector.shape_cast %4 : vector<8xf32> to vector<8x1xf32>
    %c0_3 = arith.constant 0 : index
    %6 = memref.load %arg1[%c0_3] : memref<1xf32, #tpu.memory_space<smem>>
    %7 = vector.broadcast %6 : f32 to vector<8x1xf32>
    %8 = arith.addf %5, %7 : vector<8x1xf32>
    %9 = arith.negf %8 : vector<8x1xf32>
    %10 = math.exp %9 : vector<8x1xf32>
    %cst_4 = arith.constant 1.000000e+00 : f32
    %11 = vector.broadcast %cst_4 : f32 to vector<8x1xf32>
    %12 = arith.addf %11, %10 : vector<8x1xf32>
    %13 = arith.divf %11, %12 : vector<8x1xf32>
    %c0_5 = arith.constant 0 : index
    %c0_6 = arith.constant 0 : index
    %14 = vector.load %arg4[%c0_5, %c0_6] : memref<8x1xf32, #tpu.memory_space<vmem>>, vector<8x1xf32>
    tpu.vector_store %arg4[%c0_5, %c0_6], %13 {strides = array<i32>} : memref<8x1xf32, #tpu.memory_space<vmem>>, vector<8x1xf32>,
    return
  }
  func.func @transform_0(%arg0: i32, %arg1: memref<1xf32, #tpu.memory_space<smem>>) -> (i32, i32) {
    %c0_i32 = arith.constant 0 : i32
    %c0_i32_0 = arith.constant 0 : i32
    return %arg0, %c0_i32 : i32, i32
  }
  func.func @transform_1(%arg0: i32, %arg1: memref<1xf32, #tpu.memory_space<smem>>) -> (i32, i32) {
    %c0_i32 = arith.constant 0 : i32
    %c0_i32_0 = arith.constant 0 : i32
    %c0_i32_1 = arith.constant 0 : i32
    return %c0_i32, %c0_i32_0 : i32, i32
  }
  func.func @transform_2(%arg0: i32, %arg1: memref<1xf32, #tpu.memory_space<smem>>) -> (i32, i32) {
    %c0_i32 = arith.constant 0 : i32
    %c0_i32_0 = arith.constant 0 : i32
    return %arg0, %c0_i32 : i32, i32
  }
}

</mosaic_0001>

<llo_original>
// kernel: tpu_custom_call.1
$region0: #{tpu_custom_call.1}
  #allocation0 [shape = 'u32[]', space=smem, size = 0x4, offset = 0x4, fixed_abs, tag = 'smem constant byte address 0x4 - core index']
  #allocation1 [shape = 'u32[144,128]{1,0:T(1,128)}', space=vmem, size = 0x12000, scoped, tag = 'internal scratch']
  #allocation2 [shape = 's32[1]{0}', space=sflag, size = 0x4, scoped, tag = 'scoped memory for tpu_custom_call.1']
  #allocation3 [shape = 'f32[1]{0:T(128)S(6)}', space=smem, size = 0x200, scoped, tag = 'prefetched SMEM operand 0']
  %s0 = inlined_call_operand.<no memory space> [shape: f32[1], index: 0, kind: input, shape index: {}]
  %s1 = inlined_call_operand.hbm [shape: f32[8,32], index: 1, kind: input, shape index: {}]
  %s2 = inlined_call_operand.hbm [shape: f32[1,32], index: 2, kind: input, shape index: {}]
  %s3 = inlined_call_operand.hbm [shape: f32[8,1], index: 3, kind: output, shape index: {}]
  %s4 = sld [smem:[#allocation0]]
  $region26: #{tpu_custom_call.1} parent=0
    _
  %s6 = ssub.s32 1, %s4
  %s7 = scalar_select 0, %s6, %s4
  %8 = sst [smem:[#allocation3]] %s0
  $region1: #{tpu_custom_call.1} parent=0
    #allocation4 [shape = 'u8[4096]{0}', space=vmem, size = 0x1000, scoped, tag = 'input window, operand 1, single buffered']
    #allocation5 [shape = 's32[1]{0}', space=sflag, size = 0x4, scoped, tag = 'scoped memory for tpu_custom_call.1']
    #allocation6 [shape = 's32[1]{0}', space=sflag, size = 0x4, scoped, tag = 'scoped memory for tpu_custom_call.1']
    #allocation7 [shape = 'u8[512]{0}', space=vmem, size = 0x400, scoped, tag = 'input window, operand 2, single buffered']
    #allocation8 [shape = 's32[1]{0}', space=sflag, size = 0x4, scoped, tag = 'scoped memory for tpu_custom_call.1']
    #allocation9 [shape = 'u8[4096]{0}', space=vmem, size = 0x1000, scoped, tag = 'output window, operand 0, single buffered']
    %9 = vsyncpa [#allocation5], 0
    %10 = vsyncpa [#allocation8], 0
    %11 = vsyncpa [#allocation6], 0
    // Predicated region
    $region2: #{tpu_custom_call.1} parent=1 // pred_check
      _
    $region3: #{tpu_custom_call.1} parent=1 // pred_check_branch
      %13 = sbr.rel (0) target = $region5
    $region4: #{tpu_custom_call.1} parent=1 // pred_region
      %s15 = ssub.s32 128, 128
      %16 = vsyncadd [#allocation5], %s15
      %s18 = sshll.u32 [#allocation4], 4
      %s19 = int_to_ptr.vmem [resolvable:$true] %s18
      %21 = dma.hbm_to_vmem [thread:$0]  %s1, 128, %s19, [#allocation5]
    $region5: #{tpu_custom_call.1} parent=1 // pred_fallthru
      _
    // Predicated region
    $region6: #{tpu_custom_call.1} parent=1 // pred_check
      _
    $region7: #{tpu_custom_call.1} parent=1 // pred_check_branch
      %23 = sbr.rel (0) target = $region9
    $region8: #{tpu_custom_call.1} parent=1 // pred_region
      %s25 = ssub.s32 16, 16
      %26 = vsyncadd [#allocation8], %s25
      %s28 = sshll.u32 [#allocation7], 4
      %s29 = int_to_ptr.vmem [resolvable:$true] %s28
      %31 = dma.hbm_to_vmem [thread:$0]  %s2, 16, %s29, [#allocation8]
    $region9: #{tpu_custom_call.1} parent=1 // pred_fallthru
      _
    // Predicated region
    $region10: #{tpu_custom_call.1} parent=1 // pred_check
      _
    $region11: #{tpu_custom_call.1} parent=1 // pred_check_branch
      %33 = sbr.rel (0) target = $region13
    $region12: #{tpu_custom_call.1} parent=1 // pred_region
      %34 = dma.done [#allocation5], 128
    $region13: #{tpu_custom_call.1} parent=1 // pred_fallthru
      _
    // Predicated region
    $region14: #{tpu_custom_call.1} parent=1 // pred_check
      _
    $region15: #{tpu_custom_call.1} parent=1 // pred_check_branch
      %36 = sbr.rel (0) target = $region17
    $region16: #{tpu_custom_call.1} parent=1 // pred_region
      %37 = dma.done [#allocation8], 16
    $region17: #{tpu_custom_call.1} parent=1 // pred_fallthru
      _
    %v38 = vld [vmem:[#allocation4] sm:$0xff]
    %v39 = vld [vmem:[#allocation7] sm:$0x1]
    %v41 = vlaneseq
    %v42 = vshrl.u32 %v41, 7
    %v43 = vsub.s32 0, %v42
    %v44 = vrot.slane %v39, %v43
    %v46 = vmul.f32 %v38, %v44
    %vm47 = vcmask 261120
    %v48 = vsel %vm47, %v46, 0.0
    %49 = vadd.xlane.f32.xlu0 %v48
    %v50 = vpop.xlane.xlu0 %49
    %s51 = sld [smem:[#allocation3]]
    %v52 = vstv %s51
    %v53 = vadd.f32 %v50, %v52
    %v54 = vxor.u32 %v53, 2147483648
    %v55 = vmul.f32 %v54, 1.442695
    %v56 = vpow.pop %v55
    %v57 = vadd.f32 %v56, 1.0
    %v58 = vrcp.pop %v57
    %v59 = vmul.f32 1.0, %v58
    %vm60 = vcmask 7168
    %61 = vst.msk [vmem:[#allocation9] sm:$0xff] %vm60, %v59
    // Predicated region
    $region18: #{tpu_custom_call.1} parent=1 // pred_check
      _
    $region19: #{tpu_custom_call.1} parent=1 // pred_check_branch
      %63 = sbr.rel (0) target = $region21
    $region20: #{tpu_custom_call.1} parent=1 // pred_region
      %s65 = ssub.s32 128, 128
      %66 = vsyncadd [#allocation6], %s65
      %s68 = sshll.u32 [#allocation9], 4
      %s69 = int_to_ptr.vmem [resolvable:$true] %s68
      %71 = dma.vmem_to_hbm [thread:$0]  %s69, 128, %s3, [#allocation6]
    $region21: #{tpu_custom_call.1} parent=1 // pred_fallthru
      _
    // Predicated region
    $region22: #{tpu_custom_call.1} parent=1 // pred_check
      _
    $region23: #{tpu_custom_call.1} parent=1 // pred_check_branch
      %73 = sbr.rel (0) target = $region25
    $region24: #{tpu_custom_call.1} parent=1 // pred_region
      %74 = dma.done [#allocation6], 128
    $region25: #{tpu_custom_call.1} parent=1 // pred_fallthru
      _
    %75 = vsyncpa [#allocation5], 1
    %76 = vsyncpa [#allocation8], 1
    %77 = vsyncpa [#allocation6], 1

</llo_original>
